<compile_context>
chip_gen: v7x
topology: tpu7x:2x2x1
jax: 0.10.0
libtpu: 0.0.40
codegen_flags: <defaults>
</compile_context>

<pallas_src>
import numpy as np
import jax
import jax.numpy as jnp
from jax.experimental import pallas as pl
from jax.experimental.pallas import tpu as pltpu

# ---- small, module-consistent hyper-parameters ----
BATCH = 16
INPUT_DIM = 64
HIDDEN_DIMS = [128, 128]   # layer 0: 64->128 (linear residual), layer 1: 128->128 (identity)
OUTPUT_DIM = 32
NEG_SLOPE = 0.01           # nn.LeakyReLU default negative_slope

LANE = 128                 # lane width
SUB = 8                    # f32 sublane tile


def _ceil_to(x, m):
    return ((x + m - 1) // m) * m


def _leaky_relu(x):
    # Identical to LeakyReLU(0.01) for finite inputs; cheaper than where().
    return jnp.maximum(x, NEG_SLOPE * x)


# ------------------------------ parameters ------------------------------
def init_params(key, input_dim, hidden_dims, output_dim):
    """Deterministic synthetic parameters matching the PyTorch module layout."""
    dims = [input_dim] + list(hidden_dims)
    keys = iter(jax.random.split(key, 64))

    def nrm(shape, scale):
        return (scale * jax.random.normal(next(keys), shape)).astype(jnp.float32)

    layers = []
    for i in range(len(dims) - 1):
        din, dout = dims[i], dims[i + 1]
        has_res = din != dout
        layers.append(dict(
            din=din, dout=dout, has_res=has_res,
            w=nrm((din, dout), din ** -0.5),            # fc weight (stored din x dout)
            b=nrm((dout,), 0.01),                        # fc bias
            w_res=nrm((din, dout), din ** -0.5) if has_res else None,  # res_fc (no bias)
        ))
    w_out = nrm((dims[-1], output_dim), dims[-1] ** -0.5)
    b_out = nrm((output_dim,), 0.01)
    return layers, (w_out, b_out)


# -------------------------- parameter slab packing --------------------------
def pack_params(layers, out_wb):
    """Pack every weight/bias into ONE (8,128)-aligned f32 slab.

    Layout per layer (all row offsets are multiples of 8, col extents of 128):
      weight block : rows [w_off, w_off+din_pad), cols [0, ncols)
                     ncols = 2*dout_pad when fc || res_fc are fused side-by-side
      bias block   : rows [b_off, b_off+8), row 0 holds the bias, cols [0, dout_pad)
    fc_out is packed the same way with dout padded to 128 (lane-dense output).
    Returns (slab, static layout metadata for the kernel builder).
    """
    w_out, b_out = out_wb

    def pad_w(w, din, dout, din_pad, dout_pad):
        wp = np.zeros((din_pad, dout_pad), np.float32)
        wp[:din, :dout] = np.asarray(w)
        return wp

    blocks, layout = [], []
    row, slab_w = 0, LANE

    for L in layers:
        din, dout, has_res = L["din"], L["dout"], L["has_res"]
        din_pad, dout_pad = _ceil_to(din, LANE), _ceil_to(dout, LANE)
        wcat = pad_w(L["w"], din, dout, din_pad, dout_pad)
        if has_res:   # fuse fc and res_fc into one side-by-side weight (single matmul)
            wcat = np.concatenate(
                [wcat, pad_w(L["w_res"], din, dout, din_pad, dout_pad)], axis=1)
        ncols = wcat.shape[1]
        slab_w = max(slab_w, ncols)
        w_off = row; blocks.append((w_off, wcat)); row += din_pad

        bp = np.zeros((SUB, dout_pad), np.float32)
        bp[0, :dout] = np.asarray(L["b"])
        b_off = row; blocks.append((b_off, bp)); row += SUB

        layout.append(dict(kind="res", w_off=w_off, din_pad=din_pad, ncols=ncols,
                           b_off=b_off, dout_pad=dout_pad, has_res=has_res))

    din, dout = w_out.shape
    din_pad, dout_pad = _ceil_to(din, LANE), _ceil_to(dout, LANE)
    wp = pad_w(w_out, din, dout, din_pad, dout_pad)
    w_off = row; blocks.append((w_off, wp)); row += din_pad
    bp = np.zeros((SUB, dout_pad), np.float32)
    bp[0, :dout] = np.asarray(b_out)
    b_off = row; blocks.append((b_off, bp)); row += SUB
    layout.append(dict(kind="out", w_off=w_off, din_pad=din_pad, ncols=dout_pad,
                       b_off=b_off, dout_pad=dout_pad, has_res=False))

    slab = np.zeros((_ceil_to(row, SUB), slab_w), np.float32)
    for off, arr in blocks:
        slab[off:off + arr.shape[0], :arr.shape[1]] = arr
    return jnp.asarray(slab), layout


# ------------------------------ fused kernel ------------------------------
def make_kernel(layout):
    """One fused kernel: all residual blocks + fc_out, no grid, all in VMEM."""
    def kernel(x_ref, p_ref, o_ref):
        fea = x_ref[...]                                     # (B, 128) lane-dense padded input
        for spec in layout:
            w = p_ref[spec["w_off"]:spec["w_off"] + spec["din_pad"], 0:spec["ncols"]]
            b = p_ref[spec["b_off"]:spec["b_off"] + 1, 0:spec["dout_pad"]]
            y = jnp.dot(fea, w, preferred_element_type=jnp.float32)
            if spec["kind"] == "out":
                o_ref[...] = y + b                           # lane-dense (B, 128) store
            else:
                d = spec["dout_pad"]
                if spec["has_res"]:                          # fused fc || res_fc in one matmul
                    fea = _leaky_relu(y[:, 0:d] + b) + y[:, d:2 * d]
                else:                                        # identity residual
                    fea = _leaky_relu(y + b) + fea
    return kernel


# ------------------------------ wrapper ------------------------------
def residual_network_forward(x, slab, layout, output_dim):
    n = x.shape[0]
    in_pad = layout[0]["din_pad"]
    out_pad = layout[-1]["dout_pad"]

    # Zero-pad the input K dim (64 -> 128): unmasked vector loads, identical math.
    x_pad = jnp.zeros((n, in_pad), jnp.float32).at[:, :x.shape[1]].set(x)

    flops = sum(2 * n * s["din_pad"] * s["ncols"] + 4 * n * s["dout_pad"] for s in layout)
    bytes_accessed = int((x_pad.size + slab.size + n * out_pad) * 4)

    vmem = lambda: pl.BlockSpec(memory_space=pltpu.MemorySpace.VMEM)
    out_padded = pl.pallas_call(
        make_kernel(layout),
        out_shape=jax.ShapeDtypeStruct((n, out_pad), jnp.float32),
        in_specs=[vmem(), vmem()],
        out_specs=vmem(),
        cost_estimate=pl.CostEstimate(flops=flops, transcendentals=0,
                                      bytes_accessed=bytes_accessed),
    )(x_pad, slab)
    return out_padded[:, :output_dim]


# ------------------------------ pure-JAX reference ------------------------------
def reference_forward(x, layers, out_wb):
    fea = x
    for L in layers:
        h = jnp.where(fea @ L["w"] + L["b"] > 0,
                      fea @ L["w"] + L["b"],
                      NEG_SLOPE * (fea @ L["w"] + L["b"]))
        res = fea @ L["w_res"] if L["has_res"] else fea
        fea = h + res
    w_out, b_out = out_wb
    return fea @ w_out + b_out


# ------------------------------------ main ----------------------------------
if __name__ == "__main__":
    key = jax.random.PRNGKey(0)
    k_x, k_p = jax.random.split(key)

    x = jax.random.normal(k_x, (BATCH, INPUT_DIM), dtype=jnp.float32)
    layers, out_wb = init_params(k_p, INPUT_DIM, HIDDEN_DIMS, OUTPUT_DIM)
    slab, layout = pack_params(layers, out_wb)

    out = jax.block_until_ready(
        residual_network_forward(x, slab, layout, OUTPUT_DIM))
    ref = jax.block_until_ready(reference_forward(x, layers, out_wb))

    assert out.shape == (BATCH, OUTPUT_DIM)
    assert bool(jnp.all(jnp.isfinite(out)))
    assert jnp.allclose(out, ref, atol=1e-4, rtol=1e-4)
    print("KERNEL_OK")
</pallas_src>

<mosaic_0001>
module attributes {stable_mosaic.version = 11 : i64} {
  func.func @kernel(%arg0: memref<16x128xf32, #tpu.memory_space<vmem>>, %arg1: memref<408x256xf32, #tpu.memory_space<vmem>>, %arg2: memref<16x128xf32, #tpu.memory_space<vmem>>) attributes {dimension_semantics = [], scalar_prefetch = 0 : i64, scratch_operands = 0 : i64, tpu.core_type = #tpu.core_type<tc>} {
    %c0 = arith.constant 0 : index
    %c0_0 = arith.constant 0 : index
    %0 = vector.load %arg0[%c0, %c0_0] : memref<16x128xf32, #tpu.memory_space<vmem>>, vector<16x128xf32>
    %c0_1 = arith.constant 0 : index
    %c0_2 = arith.constant 0 : index
    %1 = vector.load %arg1[%c0_1, %c0_2] : memref<408x256xf32, #tpu.memory_space<vmem>>, vector<128x256xf32>
    %c128 = arith.constant 128 : index
    %c0_3 = arith.constant 0 : index
    %2 = vector.load %arg1[%c128, %c0_3] : memref<408x256xf32, #tpu.memory_space<vmem>>, vector<1x128xf32>
    %cst = arith.constant dense<0.000000e+00> : vector<16x256xf32>
    %3 = tpu.matmul %0, %1, %cst {dimension_numbers = #tpu.dot_dimension_numbers<[1], [0], [0], [1], [0, 0, 1, 1], [], []>} : vector<16x128xf32>, vector<128x256xf32>, vector<16x256xf32> -> vector<16x256xf32>
    %4 = vector.extract_strided_slice %3 {offsets = [0, 0], sizes = [16, 128], strides = [1, 1]} : vector<16x256xf32> to vector<16x128xf32>
    %5 = vector.broadcast %2 : vector<1x128xf32> to vector<16x128xf32>
    %6 = arith.addf %4, %5 : vector<16x128xf32>
    %cst_4 = arith.constant 0.00999999977 : f32
    %7 = vector.broadcast %cst_4 : f32 to vector<16x128xf32>
    %8 = arith.mulf %7, %6 : vector<16x128xf32>
    %9 = arith.maximumf %6, %8 : vector<16x128xf32>
    %10 = vector.extract_strided_slice %3 {offsets = [0, 128], sizes = [16, 128], strides = [1, 1]} : vector<16x256xf32> to vector<16x128xf32>
    %11 = arith.addf %9, %10 : vector<16x128xf32>
    %c136 = arith.constant 136 : index
    %c0_5 = arith.constant 0 : index
    %12 = vector.load %arg1[%c136, %c0_5] : memref<408x256xf32, #tpu.memory_space<vmem>>, vector<128x128xf32>
    %c264 = arith.constant 264 : index
    %c0_6 = arith.constant 0 : index
    %13 = vector.load %arg1[%c264, %c0_6] : memref<408x256xf32, #tpu.memory_space<vmem>>, vector<1x128xf32>
    %cst_7 = arith.constant dense<0.000000e+00> : vector<16x128xf32>
    %14 = tpu.matmul %11, %12, %cst_7 {dimension_numbers = #tpu.dot_dimension_numbers<[1], [0], [0], [1], [0, 0, 1, 1], [], []>} : vector<16x128xf32>, vector<128x128xf32>, vector<16x128xf32> -> vector<16x128xf32>
    %15 = vector.broadcast %13 : vector<1x128xf32> to vector<16x128xf32>
    %16 = arith.addf %14, %15 : vector<16x128xf32>
    %cst_8 = arith.constant 0.00999999977 : f32
    %17 = vector.broadcast %cst_8 : f32 to vector<16x128xf32>
    %18 = arith.mulf %17, %16 : vector<16x128xf32>
    %19 = arith.maximumf %16, %18 : vector<16x128xf32>
    %20 = arith.addf %19, %11 : vector<16x128xf32>
    %c272 = arith.constant 272 : index
    %c0_9 = arith.constant 0 : index
    %21 = vector.load %arg1[%c272, %c0_9] : memref<408x256xf32, #tpu.memory_space<vmem>>, vector<128x128xf32>
    %c400 = arith.constant 400 : index
    %c0_10 = arith.constant 0 : index
    %22 = vector.load %arg1[%c400, %c0_10] : memref<408x256xf32, #tpu.memory_space<vmem>>, vector<1x128xf32>
    %cst_11 = arith.constant dense<0.000000e+00> : vector<16x128xf32>
    %23 = tpu.matmul %20, %21, %cst_11 {dimension_numbers = #tpu.dot_dimension_numbers<[1], [0], [0], [1], [0, 0, 1, 1], [], []>} : vector<16x128xf32>, vector<128x128xf32>, vector<16x128xf32> -> vector<16x128xf32>
    %24 = vector.broadcast %22 : vector<1x128xf32> to vector<16x128xf32>
    %25 = arith.addf %23, %24 : vector<16x128xf32>
    %c0_12 = arith.constant 0 : index
    %c0_13 = arith.constant 0 : index
    %26 = vector.load %arg2[%c0_12, %c0_13] : memref<16x128xf32, #tpu.memory_space<vmem>>, vector<16x128xf32>
    tpu.vector_store %arg2[%c0_12, %c0_13], %25 {strides = array<i32>} : memref<16x128xf32, #tpu.memory_space<vmem>>, vector<16x128xf32>,
    return
  }
}

</mosaic_0001>

<llo_original>
// kernel: tpu_custom_call.1
$region0: #{tpu_custom_call.1}
  #allocation0 [shape = 'u32[]', space=smem, size = 0x4, offset = 0x4, fixed_abs, tag = 'smem constant byte address 0x4 - core index']
  #allocation1 [shape = 'u32[144,128]{1,0:T(1,128)}', space=vmem, size = 0x12000, scoped, tag = 'internal scratch']
  %s0 = inlined_call_operand.hbm [shape: f32[16,128], index: 0, kind: input, shape index: {}]
  %s1 = inlined_call_operand.hbm [shape: f32[408,256], index: 1, kind: input, shape index: {}]
  %s2 = inlined_call_operand.hbm [shape: f32[16,128], index: 2, kind: output, shape index: {}]
  %s3 = sld [smem:[#allocation0]]
  $region26: #{tpu_custom_call.1} parent=0
    _
  %s5 = ssub.s32 1, %s3
  %s6 = scalar_select 0, %s5, %s3
  $region1: #{tpu_custom_call.1} parent=0
    #allocation2 [shape = 'u8[8192]{0}', space=vmem, size = 0x2000, scoped, tag = 'input window, operand 0, single buffered']
    #allocation3 [shape = 's32[1]{0}', space=sflag, size = 0x4, scoped, tag = 'scoped memory for tpu_custom_call.1']
    #allocation4 [shape = 's32[1]{0}', space=sflag, size = 0x4, scoped, tag = 'scoped memory for tpu_custom_call.1']
    #allocation5 [shape = 'u8[417792]{0}', space=vmem, size = 0x66000, scoped, tag = 'input window, operand 1, single buffered']
    #allocation6 [shape = 's32[1]{0}', space=sflag, size = 0x4, scoped, tag = 'scoped memory for tpu_custom_call.1']
    #allocation7 [shape = 'u8[8192]{0}', space=vmem, size = 0x2000, scoped, tag = 'output window, operand 0, single buffered']
    %7 = vsyncpa [#allocation3], 0
    %8 = vsyncpa [#allocation6], 0
    %9 = vsyncpa [#allocation4], 0
    // Predicated region
    $region2: #{tpu_custom_call.1} parent=1 // pred_check
      _
    $region3: #{tpu_custom_call.1} parent=1 // pred_check_branch
      %11 = sbr.rel (0) target = $region5
    $region4: #{tpu_custom_call.1} parent=1 // pred_region
      %s13 = ssub.s32 256, 256
      %14 = vsyncadd [#allocation3], %s13
      %s15 = sshll.u32 [#allocation2], 4
      %s16 = int_to_ptr.vmem [resolvable:$true] %s15
      %21 = dma.hbm_to_vmem [thread:$0]  %s0, 256, %s16, [#allocation3], 128, 128, 8
    $region5: #{tpu_custom_call.1} parent=1 // pred_fallthru
      _
    // Predicated region
    $region6: #{tpu_custom_call.1} parent=1 // pred_check
      _
    $region7: #{tpu_custom_call.1} parent=1 // pred_check_branch
      %23 = sbr.rel (0) target = $region9
    $region8: #{tpu_custom_call.1} parent=1 // pred_region
      %s25 = ssub.s32 13056, 13056
      %26 = vsyncadd [#allocation6], %s25
      %s27 = sshll.u32 [#allocation5], 4
      %s28 = int_to_ptr.vmem [resolvable:$true] %s27
      %33 = dma.hbm_to_vmem [thread:$0]  %s1, 13056, %s28, [#allocation6], 256, 256, 16
    $region9: #{tpu_custom_call.1} parent=1 // pred_fallthru
      _
    // Predicated region
    $region10: #{tpu_custom_call.1} parent=1 // pred_check
      _
    $region11: #{tpu_custom_call.1} parent=1 // pred_check_branch
      %35 = sbr.rel (0) target = $region13
    $region12: #{tpu_custom_call.1} parent=1 // pred_region
      %36 = dma.done [#allocation3], 256
    $region13: #{tpu_custom_call.1} parent=1 // pred_fallthru
      _
    // Predicated region
    $region14: #{tpu_custom_call.1} parent=1 // pred_check
      _
    $region15: #{tpu_custom_call.1} parent=1 // pred_check_branch
      %38 = sbr.rel (0) target = $region17
    $region16: #{tpu_custom_call.1} parent=1 // pred_region
      %39 = dma.done [#allocation6], 13056
    $region17: #{tpu_custom_call.1} parent=1 // pred_fallthru
      _
    %v40 = vld [vmem:[#allocation2] sm:$0xff]
    %v41 = vld [vmem:[#allocation2 + $0x8] sm:$0xff]
    %v42 = vld [vmem:[#allocation5] sm:$0xff]
    %v43 = vld [vmem:[#allocation5 + $0x8] sm:$0xff]
    %v44 = vld [vmem:[#allocation5 + $0x10] sm:$0xff]
    %v45 = vld [vmem:[#allocation5 + $0x18] sm:$0xff]
    %v46 = vld [vmem:[#allocation5 + $0x20] sm:$0xff]
    %v47 = vld [vmem:[#allocation5 + $0x28] sm:$0xff]
    %v48 = vld [vmem:[#allocation5 + $0x30] sm:$0xff]
    %v49 = vld [vmem:[#allocation5 + $0x38] sm:$0xff]
    %v50 = vld [vmem:[#allocation5 + $0x40] sm:$0xff]
    %v51 = vld [vmem:[#allocation5 + $0x48] sm:$0xff]
    %v52 = vld [vmem:[#allocation5 + $0x50] sm:$0xff]
    %v53 = vld [vmem:[#allocation5 + $0x58] sm:$0xff]
    %v54 = vld [vmem:[#allocation5 + $0x60] sm:$0xff]
    %v55 = vld [vmem:[#allocation5 + $0x68] sm:$0xff]
    %v56 = vld [vmem:[#allocation5 + $0x70] sm:$0xff]
    %v57 = vld [vmem:[#allocation5 + $0x78] sm:$0xff]
    %v58 = vld [vmem:[#allocation5 + $0x80] sm:$0xff]
    %v59 = vld [vmem:[#allocation5 + $0x88] sm:$0xff]
    %v60 = vld [vmem:[#allocation5 + $0x90] sm:$0xff]
    %v61 = vld [vmem:[#allocation5 + $0x98] sm:$0xff]
    %v62 = vld [vmem:[#allocation5 + $0xa0] sm:$0xff]
    %v63 = vld [vmem:[#allocation5 + $0xa8] sm:$0xff]
    %v64 = vld [vmem:[#allocation5 + $0xb0] sm:$0xff]
    %v65 = vld [vmem:[#allocation5 + $0xb8] sm:$0xff]
    %v66 = vld [vmem:[#allocation5 + $0xc0] sm:$0xff]
    %v67 = vld [vmem:[#allocation5 + $0xc8] sm:$0xff]
    %v68 = vld [vmem:[#allocation5 + $0xd0] sm:$0xff]
    %v69 = vld [vmem:[#allocation5 + $0xd8] sm:$0xff]
    %v70 = vld [vmem:[#allocation5 + $0xe0] sm:$0xff]
    %v71 = vld [vmem:[#allocation5 + $0xe8] sm:$0xff]
    %v72 = vld [vmem:[#allocation5 + $0xf0] sm:$0xff]
    %v73 = vld [vmem:[#allocation5 + $0xf8] sm:$0xff]
    %v74 = vld [vmem:[#allocation5 + $0x100] ss:$0 sm:$0xff]
    %75 = vmatprep.subr.mxu0 %v43
    %76 = vmatpush1.msra.mxu0 %v42
    %77 = vmatprep.subr.mxu0 %v45
    %78 = vmatpush1.msra.mxu0 %v44
    %79 = vmatprep.subr.mxu0 %v47
    %80 = vmatpush1.msra.mxu0 %v46
    %81 = vmatprep.subr.mxu0 %v49
    %82 = vmatpush1.msra.mxu0 %v48
    %83 = vmatprep.subr.mxu0 %v51
    %84 = vmatpush1.msra.mxu0 %v50
    %85 = vmatprep.subr.mxu0 %v53
    %86 = vmatpush1.msra.mxu0 %v52
    %87 = vmatprep.subr.mxu0 %v55
    %88 = vmatpush1.msra.mxu0 %v54
    %89 = vmatprep.subr.mxu0 %v57
    %90 = vmatpush1.msra.mxu0 %v56
    %91 = vmatprep.subr.mxu0 %v59
    %92 = vmatpush1.msra.mxu0 %v58
    %93 = vmatprep.subr.mxu0 %v61
    %94 = vmatpush1.msra.mxu0 %v60
    %95 = vmatprep.subr.mxu0 %v63
    %96 = vmatpush1.msra.mxu0 %v62
    %97 = vmatprep.subr.mxu0 %v65
    %98 = vmatpush1.msra.mxu0 %v64
    %99 = vmatprep.subr.mxu0 %v67
    %100 = vmatpush1.msra.mxu0 %v66
    %101 = vmatprep.subr.mxu0 %v69
    %102 = vmatpush1.msra.mxu0 %v68
    %103 = vmatprep.subr.mxu0 %v71
    %104 = vmatpush1.msra.mxu0 %v70
    %105 = vmatprep.subr.mxu0 %v73
    %106 = vmatpush1.msra.mxu0 %v72
    %107 = vmatprep.subr.mxu0 0.0
    %108 = vmatpush1.msra.mxu0 0.0
    %109 = vmatprep.subr.mxu0 0.0
    %110 = vmatpush1.msra.mxu0 0.0
    %111 = vmatprep.subr.mxu0 0.0
    %112 = vmatpush1.msra.mxu0 0.0
    %113 = vmatprep.subr.mxu0 0.0
    %114 = vmatpush1.msra.mxu0 0.0
    %115 = vmatprep.subr.mxu0 0.0
    %116 = vmatpush1.msra.mxu0 0.0
    %117 = vmatprep.subr.mxu0 0.0
    %118 = vmatpush1.msra.mxu0 0.0
    %119 = vmatprep.subr.mxu0 0.0
    %120 = vmatpush1.msra.mxu0 0.0
    %121 = vmatprep.subr.mxu0 0.0
    %122 = vmatpush1.msra.mxu0 0.0
    %123 = vmatprep.subr.mxu0 0.0
    %124 = vmatpush1.msra.mxu0 0.0
    %125 = vmatprep.subr.mxu0 0.0
    %126 = vmatpush1.msra.mxu0 0.0
    %127 = vmatprep.subr.mxu0 0.0
    %128 = vmatpush1.msra.mxu0 0.0
    %129 = vmatprep.subr.mxu0 0.0
    %130 = vmatpush1.msra.mxu0 0.0
    %131 = vmatprep.subr.mxu0 0.0
    %132 = vmatpush1.msra.mxu0 0.0
    %133 = vmatprep.subr.mxu0 0.0
    %134 = vmatpush1.msra.mxu0 0.0
    %135 = vmatprep.subr.mxu0 0.0
    %136 = vmatpush1.msra.mxu0 0.0
    %137 = vmatprep.subr.mxu0 0.0
    %138 = vmatpush1.msra.mxu0 0.0
    %139 = vmatprep.mubr.f32.mxu0 0.0
    %140 = vmatmul.mubr.f32.gmra.mrb[0].mxu0 %v40
    %v141 = vpop.f32.mrb[0].mxu0
    %v142 = vadd.f32 0.0, %v141
    %v143 = vpop.f32.mrb[0].mxu0
    %v144 = vadd.f32 0.0, %v143
    %145 = vmatprep.mubr.f32.mxu0 0.0
    %146 = vmatmul.mubr.f32.gmra.mrb[0].mxu0 %v41
    %v147 = vpop.f32.mrb[0].mxu0
    %v148 = vadd.f32 0.0, %v147
    %v149 = vpop.f32.mrb[0].mxu0
    %v150 = vadd.f32 0.0, %v149
    %151 = vdwg.mxu0
    %v152 = vadd.f32 %v142, %v74
    %v153 = vadd.f32 %v148, %v74
    %v154 = vmul.f32 %v152, 0.01
    %v155 = vmul.f32 %v153, 0.01
    %v156 = vmax.f32 %v152, %v154
    %v157 = vmax.f32 %v153, %v155
    %v158 = vadd.f32 %v156, %v144
    %v159 = vadd.f32 %v157, %v150
    %v160 = vld [vmem:[#allocation5 + $0x110] sm:$0xff]
    %v161 = vld [vmem:[#allocation5 + $0x120] sm:$0xff]
    %v162 = vld [vmem:[#allocation5 + $0x130] sm:$0xff]
    %v163 = vld [vmem:[#allocation5 + $0x140] sm:$0xff]
    %v164 = vld [vmem:[#allocation5 + $0x150] sm:$0xff]
    %v165 = vld [vmem:[#allocation5 + $0x160] sm:$0xff]
    %v166 = vld [vmem:[#allocation5 + $0x170] sm:$0xff]
    %v167 = vld [vmem:[#allocation5 + $0x180] sm:$0xff]
    %v168 = vld [vmem:[#allocation5 + $0x190] sm:$0xff]
    %v169 = vld [vmem:[#allocation5 + $0x1a0] sm:$0xff]
    %v170 = vld [vmem:[#allocation5 + $0x1b0] sm:$0xff]
    %v171 = vld [vmem:[#allocation5 + $0x1c0] sm:$0xff]
    %v172 = vld [vmem:[#allocation5 + $0x1d0] sm:$0xff]
    %v173 = vld [vmem:[#allocation5 + $0x1e0] sm:$0xff]
    %v174 = vld [vmem:[#allocation5 + $0x1f0] sm:$0xff]
    %v175 = vld [vmem:[#allocation5 + $0x200] sm:$0xff]
    %v176 = vld [vmem:[#allocation5 + $0x210] ss:$0 sm:$0xff]
    %177 = vmatprep.subr.mxu0 0.0
    %178 = vmatpush1.msra.mxu0 %v160
    %179 = vmatprep.subr.mxu0 0.0
    %180 = vmatpush1.msra.mxu0 %v161
    %181 = vmatprep.subr.mxu0 0.0
    %182 = vmatpush1.msra.mxu0 %v162
    %183 = vmatprep.subr.mxu0 0.0
    %184 = vmatpush1.msra.mxu0 %v163
    %185 = vmatprep.subr.mxu0 0.0
    %186 = vmatpush1.msra.mxu0 %v164
    %187 = vmatprep.subr.mxu0 0.0
    %188 = vmatpush1.msra.mxu0 %v165
    %189 = vmatprep.subr.mxu0 0.0
    %190 = vmatpush1.msra.mxu0 %v166
    %191 = vmatprep.subr.mxu0 0.0
    %192 = vmatpush1.msra.mxu0 %v167
    %193 = vmatprep.subr.mxu0 0.0
    %194 = vmatpush1.msra.mxu0 %v168
    %195 = vmatprep.subr.mxu0 0.0
    %196 = vmatpush1.msra.mxu0 %v169
    %197 = vmatprep.subr.mxu0 0.0
    %198 = vmatpush1.msra.mxu0 %v170
    %199 = vmatprep.subr.mxu0 0.0
    %200 = vmatpush1.msra.mxu0 %v171
    %201 = vmatprep.subr.mxu0 0.0
    %202 = vmatpush1.msra.mxu0 %v172
    %203 = vmatprep.subr.mxu0 0.0
    %204 = vmatpush1.msra.mxu0 %v173
    %205 = vmatprep.subr.mxu0 0.0
    %206 = vmatpush1.msra.mxu0 %v174
    %207 = vmatprep.subr.mxu0 0.0
    %208 = vmatpush1.msra.mxu0 %v175
    %209 = vmatprep.subr.mxu0 0.0
    %210 = vmatpush1.msra.mxu0 0.0
    %211 = vmatprep.subr.mxu0 0.0
    %212 = vmatpush1.msra.mxu0 0.0
    %213 = vmatprep.subr.mxu0 0.0
    %214 = vmatpush1.msra.mxu0 0.0
    %215 = vmatprep.subr.mxu0 0.0
    %216 = vmatpush1.msra.mxu0 0.0
    %217 = vmatprep.subr.mxu0 0.0
    %218 = vmatpush1.msra.mxu0 0.0
    %219 = vmatprep.subr.mxu0 0.0
    %220 = vmatpush1.msra.mxu0 0.0
    %221 = vmatprep.subr.mxu0 0.0
    %222 = vmatpush1.msra.mxu0 0.0
    %223 = vmatprep.subr.mxu0 0.0
    %224 = vmatpush1.msra.mxu0 0.0
    %225 = vmatprep.subr.mxu0 0.0
    %226 = vmatpush1.msra.mxu0 0.0
    %227 = vmatprep.subr.mxu0 0.0
    %228 = vmatpush1.msra.mxu0 0.0
    %229 = vmatprep.subr.mxu0 0.0
    %230 = vmatpush1.msra.mxu0 0.0
    %231 = vmatprep.subr.mxu0 0.0
    %232 = vmatpush1.msra.mxu0 0.0
    %233 = vmatprep.subr.mxu0 0.0
    %234 = vmatpush1.msra.mxu0 0.0
    %235 = vmatprep.subr.mxu0 0.0
    %236 = vmatpush1.msra.mxu0 0.0
    %237 = vmatprep.subr.mxu0 0.0
    %238 = vmatpush1.msra.mxu0 0.0
    %239 = vmatprep.subr.mxu0 0.0
    %240 = vmatpush1.msra.mxu0 0.0
    %241 = vmatprep.mubr.f32.mxu0 0.0
    %242 = vmatmul.mubr.f32.gmra.mrb[0].mxu0 %v158
    %v243 = vpop.f32.mrb[0].mxu0
    %v244 = vadd.f32 %v176, %v243
    %v245 = vpop.f32.mrb[0].mxu0
    %246 = vmatprep.mubr.f32.mxu0 0.0
    %247 = vmatmul.mubr.f32.gmra.mrb[0].mxu0 %v159
    %v248 = vpop.f32.mrb[0].mxu0
    %v249 = vadd.f32 %v176, %v248
    %v250 = vpop.f32.mrb[0].mxu0
    %251 = vdwg.mxu0
    %v252 = vmul.f32 %v244, 0.01
    %v253 = vmul.f32 %v249, 0.01
    %v254 = vmax.f32 %v244, %v252
    %v255 = vmax.f32 %v249, %v253
    %v256 = vadd.f32 %v254, %v158
    %v257 = vadd.f32 %v255, %v159
    %v258 = vld [vmem:[#allocation5 + $0x220] sm:$0xff]
    %v259 = vld [vmem:[#allocation5 + $0x230] sm:$0xff]
    %v260 = vld [vmem:[#allocation5 + $0x240] sm:$0xff]
    %v261 = vld [vmem:[#allocation5 + $0x250] sm:$0xff]
    %v262 = vld [vmem:[#allocation5 + $0x260] sm:$0xff]
    %v263 = vld [vmem:[#allocation5 + $0x270] sm:$0xff]
    %v264 = vld [vmem:[#allocation5 + $0x280] sm:$0xff]
    %v265 = vld [vmem:[#allocation5 + $0x290] sm:$0xff]
    %v266 = vld [vmem:[#allocation5 + $0x2a0] sm:$0xff]
    %v267 = vld [vmem:[#allocation5 + $0x2b0] sm:$0xff]
    %v268 = vld [vmem:[#allocation5 + $0x2c0] sm:$0xff]
    %v269 = vld [vmem:[#allocation5 + $0x2d0] sm:$0xff]
    %v270 = vld [vmem:[#allocation5 + $0x2e0] sm:$0xff]
    %v271 = vld [vmem:[#allocation5 + $0x2f0] sm:$0xff]
    %v272 = vld [vmem:[#allocation5 + $0x300] sm:$0xff]
    %v273 = vld [vmem:[#allocation5 + $0x310] sm:$0xff]
    %v274 = vld [vmem:[#allocation5 + $0x320] ss:$0 sm:$0xff]
    %275 = vmatprep.subr.mxu0 0.0
    %276 = vmatpush1.msra.mxu0 %v258
    %277 = vmatprep.subr.mxu0 0.0
    %278 = vmatpush1.msra.mxu0 %v259
    %279 = vmatprep.subr.mxu0 0.0
    %280 = vmatpush1.msra.mxu0 %v260
    %281 = vmatprep.subr.mxu0 0.0
    %282 = vmatpush1.msra.mxu0 %v261
    %283 = vmatprep.subr.mxu0 0.0
    %284 = vmatpush1.msra.mxu0 %v262
    %285 = vmatprep.subr.mxu0 0.0
    %286 = vmatpush1.msra.mxu0 %v263
    %287 = vmatprep.subr.mxu0 0.0
    %288 = vmatpush1.msra.mxu0 %v264
    %289 = vmatprep.subr.mxu0 0.0
    %290 = vmatpush1.msra.mxu0 %v265
    %291 = vmatprep.subr.mxu0 0.0
    %292 = vmatpush1.msra.mxu0 %v266
    %293 = vmatprep.subr.mxu0 0.0
    %294 = vmatpush1.msra.mxu0 %v267
    %295 = vmatprep.subr.mxu0 0.0
    %296 = vmatpush1.msra.mxu0 %v268
    %297 = vmatprep.subr.mxu0 0.0
    %298 = vmatpush1.msra.mxu0 %v269
    %299 = vmatprep.subr.mxu0 0.0
    %300 = vmatpush1.msra.mxu0 %v270
    %301 = vmatprep.subr.mxu0 0.0
    %302 = vmatpush1.msra.mxu0 %v271
    %303 = vmatprep.subr.mxu0 0.0
    %304 = vmatpush1.msra.mxu0 %v272
    %305 = vmatprep.subr.mxu0 0.0
    %306 = vmatpush1.msra.mxu0 %v273
    %307 = vmatprep.subr.mxu0 0.0
    %308 = vmatpush1.msra.mxu0 0.0
    %309 = vmatprep.subr.mxu0 0.0
    %310 = vmatpush1.msra.mxu0 0.0
    %311 = vmatprep.subr.mxu0 0.0
    %312 = vmatpush1.msra.mxu0 0.0
    %313 = vmatprep.subr.mxu0 0.0
    %314 = vmatpush1.msra.mxu0 0.0
    %315 = vmatprep.subr.mxu0 0.0
    %316 = vmatpush1.msra.mxu0 0.0
    %317 = vmatprep.subr.mxu0 0.0
    %318 = vmatpush1.msra.mxu0 0.0
    %319 = vmatprep.subr.mxu0 0.0
    %320 = vmatpush1.msra.mxu0 0.0
    %321 = vmatprep.subr.mxu0 0.0
    %322 = vmatpush1.msra.mxu0 0.0
    %323 = vmatprep.subr.mxu0 0.0
    %324 = vmatpush1.msra.mxu0 0.0
    %325 = vmatprep.subr.mxu0 0.0
    %326 = vmatpush1.msra.mxu0 0.0
    %327 = vmatprep.subr.mxu0 0.0
    %328 = vmatpush1.msra.mxu0 0.0
    %329 = vmatprep.subr.mxu0 0.0
    %330 = vmatpush1.msra.mxu0 0.0
    %331 = vmatprep.subr.mxu0 0.0
    %332 = vmatpush1.msra.mxu0 0.0
    %333 = vmatprep.subr.mxu0 0.0
    %334 = vmatpush1.msra.mxu0 0.0
    %335 = vmatprep.subr.mxu0 0.0
    %336 = vmatpush1.msra.mxu0 0.0
    %337 = vmatprep.subr.mxu0 0.0
    %338 = vmatpush1.msra.mxu0 0.0
    %339 = vmatprep.mubr.f32.mxu0 0.0
    %340 = vmatmul.mubr.f32.gmra.mrb[0].mxu0 %v256
    %v341 = vpop.f32.mrb[0].mxu0
    %v342 = vadd.f32 %v274, %v341
    %v343 = vpop.f32.mrb[0].mxu0
    %344 = vmatprep.mubr.f32.mxu0 0.0
    %345 = vmatmul.mubr.f32.gmra.mrb[0].mxu0 %v257
    %v346 = vpop.f32.mrb[0].mxu0
    %v347 = vadd.f32 %v274, %v346
    %v348 = vpop.f32.mrb[0].mxu0
    %349 = vdwg.mxu0
    %350 = vst [vmem:[#allocation7] sm:$0xff] %v342
    %351 = vst [vmem:[#allocation7 + $0x8] sm:$0xff] %v347
    // Predicated region
    $region18: #{tpu_custom_call.1} parent=1 // pred_check
      _
    $region19: #{tpu_custom_call.1} parent=1 // pred_check_branch
      %353 = sbr.rel (0) target = $region21
    $region20: #{tpu_custom_call.1} parent=1 // pred_region
      %s355 = ssub.s32 256, 256
      %356 = vsyncadd [#allocation4], %s355
      %s357 = sshll.u32 [#allocation7], 4
      %s358 = int_to_ptr.vmem [resolvable:$true] %s357
      %363 = dma.vmem_to_hbm [thread:$0]  %s358, 256, %s2, [#allocation4], 128, 128, 8
    $region21: #{tpu_custom_call.1} parent=1 // pred_fallthru
      _
    // Predicated region
    $region22: #{tpu_custom_call.1} parent=1 // pred_check
      _
    $region23: #{tpu_custom_call.1} parent=1 // pred_check_branch
      %365 = sbr.rel (0) target = $region25
    $region24: #{tpu_custom_call.1} parent=1 // pred_region
      %366 = dma.done [#allocation4], 256
    $region25: #{tpu_custom_call.1} parent=1 // pred_fallthru
      _
    %367 = vsyncpa [#allocation3], 1
    %368 = vsyncpa [#allocation6], 1
    %369 = vsyncpa [#allocation4], 1

</llo_original>
